<compile_context>
chip_gen: v6e
topology: v6e:2x2x1
jax: 0.10.0
libtpu: 0.0.40
codegen_flags: <defaults>
</compile_context>

<pallas_src>
import jax
import jax.numpy as jnp
from jax.experimental import pallas as pl
from jax.experimental.pallas import tpu as pltpu


def _mock_g_kernel(z_ref, w_ref, b_ref, img_ref, out_ref):
    """One batch-tile of Mock_g.forward.

    Ref shapes (tb = batch tile, S = img_size):
      z_ref:   (tb, 10)
      w_ref:   (10, 3*S)     w_ref[i, k*S + s] == W_linear[3*s + k, i]
      b_ref:   (1, 3*S)      b_ref[0, k*S + s] == b_linear[3*s + k]
      img_ref: (tb, 3, S)
      out_ref: (tb, 3*S*S)   flat, fully lane-dense output layout
    """
    tb = z_ref.shape[0]
    s = img_ref.shape[-1]

    z = z_ref[...]          # (tb, 10)
    img = img_ref[...]      # (tb, 3, S)

    # Single fused MXU matmul; fc[b, k*S + s] == a[b, s, k] == fc_torch[b, 3*s + k].
    fc = jnp.dot(z, w_ref[...], preferred_element_type=jnp.float32) + b_ref[...]

    # bmm(a, img): static unroll over the size-3 contraction (VPU outer products),
    # using free static slices of the single matmul result.
    acc = jnp.zeros((tb, s, s), jnp.float32)
    for k in range(3):
        ak = fc[:, k * s:(k + 1) * s]                    # (tb, S) == a[:, :, k]
        acc = acc + ak[:, :, None] * img[:, k:k + 1, :]  # (tb, S, S)

    # One relayout to the lane-dense layout (stores below are fully dense).
    acc_flat = acc.reshape(tb, s * s)                    # (tb, S*S)

    # cat([out, out, out], dim=1): three dense stores at 128-aligned static offsets.
    for c in range(3):
        out_ref[:, c * s * s:(c + 1) * s * s] = acc_flat


def pack_mock_g_params(weight, bias, img_size):
    """Repack nn.Linear(10, 3*S) params once (hoisted out of the forward path).

    Returns W2 (10, 3*S) and b2 (1, 3*S) such that
      (z @ W2 + b2)[b, k*S + s] == (z @ W.T + b)[b, 3*s + k].
    """
    w2 = (
        weight.reshape(img_size, 3, 10)     # [s, k, i] = W[3*s + k, i]
        .transpose(1, 0, 2)                 # [k, s, i]
        .reshape(3 * img_size, 10)          # [k*S + s, i]
        .T                                  # (10, 3*S)
    )
    b2 = bias.reshape(img_size, 3).T.reshape(1, 3 * img_size)   # [0, k*S + s]
    return w2, b2


def _round_up(x, m):
    return ((x + m - 1) // m) * m


def _choose_batch_tile(batch):
    """Batch tile: whole batch if tiny; else big sublane-aligned tiles, but keep
    >= 2 grid steps so the 'parallel' axis can shard across v7x's two TensorCores.
    Per-row VMEM is ~12.5 KB, so even tb=256 double-buffered is ~7 MB (fits every
    generation, incl. v7x 64 MiB)."""
    if batch <= 8:
        return batch
    return min(256, _round_up(-(-batch // 2), 8))


def mock_g_forward(noise, labels, w2, b2, img, *, img_size):
    """Pallas Mock_g.forward. noise: (B,10) f32, labels: (B,) (unused), img: (B,3,S)."""
    del labels  # unused by the PyTorch forward as well
    batch = noise.shape[0]
    s = img_size

    tb = _choose_batch_tile(batch)
    nb = pl.cdiv(batch, tb)

    out_flat = pl.pallas_call(
        _mock_g_kernel,
        out_shape=jax.ShapeDtypeStruct((batch, 3 * s * s), jnp.float32),
        grid=(nb,),
        in_specs=[
            pl.BlockSpec((tb, 10), lambda i: (i, 0)),          # noise, batch-tiled
            pl.BlockSpec((10, 3 * s), lambda i: (0, 0)),       # packed weight (tiny)
            pl.BlockSpec((1, 3 * s), lambda i: (0, 0)),        # packed bias (tiny)
            pl.BlockSpec((tb, 3, s), lambda i: (i, 0, 0)),     # img, batch-tiled
        ],
        out_specs=pl.BlockSpec((tb, 3 * s * s), lambda i: (i, 0)),
        compiler_params=pltpu.CompilerParams(
            dimension_semantics=("parallel",),
            vmem_limit_bytes=32 * 1024 * 1024,
        ),
    )(noise, w2, b2, img)

    # Contiguous (free) reshape back to the PyTorch NCHW-style result.
    return out_flat.reshape(batch, 3, s, s)


def _reference(noise, weight, bias, img, img_size):
    batch = noise.shape[0]
    fc = noise @ weight.T + bias                        # (B, 3S)
    a = fc.reshape(batch, img_size, 3)                  # (B, S, 3)
    ref = jnp.einsum("bsk,bkt->bst", a, img)            # (B, S, S)
    return jnp.broadcast_to(ref[:, None], (batch, 3, img_size, img_size))


if __name__ == "__main__":
    img_size = 32

    key = jax.random.PRNGKey(0)
    k_z, k_l, k_w, k_b, k_img, k_z2, k_img2 = jax.random.split(key, 7)

    # Deterministic nn.Linear(10, 3*img_size)-shaped parameters (uniform +-1/sqrt(10)).
    bound = 1.0 / (10.0 ** 0.5)
    weight = jax.random.uniform(k_w, (3 * img_size, 10), jnp.float32, -bound, bound)
    bias = jax.random.uniform(k_b, (3 * img_size,), jnp.float32, -bound, bound)

    # Param repack hoisted out of the forward path (done once).
    w2, b2 = pack_mock_g_params(weight, bias, img_size)

    # --- Primary small-shape run (batch=2, single grid step) ---
    batch = 2
    noise = jax.random.normal(k_z, (batch, 10), jnp.float32)
    labels = jax.random.randint(k_l, (batch,), 0, 10, jnp.int32)  # unused, as in PyTorch
    img = jax.random.normal(k_img, (batch, 3, img_size), jnp.float32)

    out = mock_g_forward(noise, labels, w2, b2, img, img_size=img_size)
    out = jax.block_until_ready(out)

    ref = _reference(noise, weight, bias, img, img_size)
    assert out.shape == (batch, 3, img_size, img_size)
    assert out.dtype == jnp.float32
    assert jnp.allclose(out, ref, atol=1e-4, rtol=1e-4)

    # --- Non-multiple-of-tile batch (exercises multi-step grid + padded edge block) ---
    batch2 = 12
    noise2 = jax.random.normal(k_z2, (batch2, 10), jnp.float32)
    labels2 = jnp.zeros((batch2,), jnp.int32)
    img2 = jax.random.normal(k_img2, (batch2, 3, img_size), jnp.float32)

    out2 = mock_g_forward(noise2, labels2, w2, b2, img2, img_size=img_size)
    out2 = jax.block_until_ready(out2)
    ref2 = _reference(noise2, weight, bias, img2, img_size)
    assert out2.shape == (batch2, 3, img_size, img_size)
    assert jnp.allclose(out2, ref2, atol=1e-4, rtol=1e-4)

    print("KERNEL_OK")
</pallas_src>

<mosaic_0001>
module attributes {stable_mosaic.version = 11 : i64} {
  func.func @_mock_g_kernel(%arg0: i32, %arg1: memref<2x10xf32, #tpu.memory_space<vmem>>, %arg2: memref<10x96xf32, #tpu.memory_space<vmem>>, %arg3: memref<1x96xf32, #tpu.memory_space<vmem>>, %arg4: memref<2x3x32xf32, #tpu.memory_space<vmem>>, %arg5: memref<2x3072xf32, #tpu.memory_space<vmem>>) attributes {dimension_semantics = [#tpu.dimension_semantics<parallel>], iteration_bounds = array<i64: 1>, scalar_prefetch = 0 : i64, scratch_operands = 0 : i64, tpu.core_type = #tpu.core_type<tc>, window_params = [{transform_indices = @transform_0, window_bounds = array<i64: 2, 10>}, {pipeline_mode = #tpu.pipeline_mode<synchronous>, transform_indices = @transform_1, window_bounds = array<i64: 10, 96>}, {pipeline_mode = #tpu.pipeline_mode<synchronous>, transform_indices = @transform_2, window_bounds = array<i64: 1, 96>}, {transform_indices = @transform_3, window_bounds = array<i64: 2, 3, 32>}, {transform_indices = @transform_4, window_bounds = array<i64: 2, 3072>}]} {
    %c0 = arith.constant 0 : index
    %c0_0 = arith.constant 0 : index
    %0 = vector.load %arg1[%c0, %c0_0] : memref<2x10xf32, #tpu.memory_space<vmem>>, vector<2x10xf32>
    %c0_1 = arith.constant 0 : index
    %c0_2 = arith.constant 0 : index
    %c0_3 = arith.constant 0 : index
    %1 = vector.load %arg4[%c0_1, %c0_2, %c0_3] : memref<2x3x32xf32, #tpu.memory_space<vmem>>, vector<2x3x32xf32>
    %c0_4 = arith.constant 0 : index
    %c0_5 = arith.constant 0 : index
    %2 = vector.load %arg2[%c0_4, %c0_5] : memref<10x96xf32, #tpu.memory_space<vmem>>, vector<10x96xf32>
    %cst = arith.constant dense<0.000000e+00> : vector<2x96xf32>
    %3 = tpu.matmul %0, %2, %cst {dimension_numbers = #tpu.dot_dimension_numbers<[1], [0], [0], [1], [0, 0, 1, 1], [], []>} : vector<2x10xf32>, vector<10x96xf32>, vector<2x96xf32> -> vector<2x96xf32>
    %c0_6 = arith.constant 0 : index
    %c0_7 = arith.constant 0 : index
    %4 = vector.load %arg3[%c0_6, %c0_7] : memref<1x96xf32, #tpu.memory_space<vmem>>, vector<1x96xf32>
    %5 = vector.broadcast %4 : vector<1x96xf32> to vector<2x96xf32>
    %6 = arith.addf %3, %5 : vector<2x96xf32>
    %cst_8 = arith.constant 0.000000e+00 : f32
    %7 = vector.broadcast %cst_8 : f32 to vector<2x32x32xf32>
    %8 = vector.extract_strided_slice %6 {offsets = [0, 0], sizes = [2, 32], strides = [1, 1]} : vector<2x96xf32> to vector<2x32xf32>
    %9 = vector.shape_cast %8 : vector<2x32xf32> to vector<2x32x1xf32>
    %10 = vector.extract_strided_slice %1 {offsets = [0, 0, 0], sizes = [2, 1, 32], strides = [1, 1, 1]} : vector<2x3x32xf32> to vector<2x1x32xf32>
    %11 = vector.broadcast %9 : vector<2x32x1xf32> to vector<2x32x32xf32>
    %12 = vector.broadcast %10 : vector<2x1x32xf32> to vector<2x32x32xf32>
    %13 = arith.mulf %11, %12 : vector<2x32x32xf32>
    %14 = arith.addf %7, %13 : vector<2x32x32xf32>
    %15 = vector.extract_strided_slice %6 {offsets = [0, 32], sizes = [2, 32], strides = [1, 1]} : vector<2x96xf32> to vector<2x32xf32>
    %16 = vector.shape_cast %15 : vector<2x32xf32> to vector<2x32x1xf32>
    %17 = vector.extract_strided_slice %1 {offsets = [0, 1, 0], sizes = [2, 1, 32], strides = [1, 1, 1]} : vector<2x3x32xf32> to vector<2x1x32xf32>
    %18 = vector.broadcast %16 : vector<2x32x1xf32> to vector<2x32x32xf32>
    %19 = vector.broadcast %17 : vector<2x1x32xf32> to vector<2x32x32xf32>
    %20 = arith.mulf %18, %19 : vector<2x32x32xf32>
    %21 = arith.addf %14, %20 : vector<2x32x32xf32>
    %22 = vector.extract_strided_slice %6 {offsets = [0, 64], sizes = [2, 32], strides = [1, 1]} : vector<2x96xf32> to vector<2x32xf32>
    %23 = vector.shape_cast %22 : vector<2x32xf32> to vector<2x32x1xf32>
    %24 = vector.extract_strided_slice %1 {offsets = [0, 2, 0], sizes = [2, 1, 32], strides = [1, 1, 1]} : vector<2x3x32xf32> to vector<2x1x32xf32>
    %25 = vector.broadcast %23 : vector<2x32x1xf32> to vector<2x32x32xf32>
    %26 = vector.broadcast %24 : vector<2x1x32xf32> to vector<2x32x32xf32>
    %27 = arith.mulf %25, %26 : vector<2x32x32xf32>
    %28 = arith.addf %21, %27 : vector<2x32x32xf32>
    %29 = vector.shape_cast %28 : vector<2x32x32xf32> to vector<2x1024xf32>
    %c0_9 = arith.constant 0 : index
    %c0_10 = arith.constant 0 : index
    %30 = vector.load %arg5[%c0_9, %c0_10] : memref<2x3072xf32, #tpu.memory_space<vmem>>, vector<2x1024xf32>
    tpu.vector_store %arg5[%c0_9, %c0_10], %29 {strides = array<i32>} : memref<2x3072xf32, #tpu.memory_space<vmem>>, vector<2x1024xf32>,
    %c0_11 = arith.constant 0 : index
    %c1024 = arith.constant 1024 : index
    %31 = vector.load %arg5[%c0_11, %c1024] : memref<2x3072xf32, #tpu.memory_space<vmem>>, vector<2x1024xf32>
    tpu.vector_store %arg5[%c0_11, %c1024], %29 {strides = array<i32>} : memref<2x3072xf32, #tpu.memory_space<vmem>>, vector<2x1024xf32>,
    %c0_12 = arith.constant 0 : index
    %c2048 = arith.constant 2048 : index
    %32 = vector.load %arg5[%c0_12, %c2048] : memref<2x3072xf32, #tpu.memory_space<vmem>>, vector<2x1024xf32>
    tpu.vector_store %arg5[%c0_12, %c2048], %29 {strides = array<i32>} : memref<2x3072xf32, #tpu.memory_space<vmem>>, vector<2x1024xf32>,
    return
  }
  func.func @transform_0(%arg0: i32) -> (i32, i32) {
    %c0_i32 = arith.constant 0 : i32
    %c0_i32_0 = arith.constant 0 : i32
    return %arg0, %c0_i32 : i32, i32
  }
  func.func @transform_1(%arg0: i32) -> (i32, i32) {
    %c0_i32 = arith.constant 0 : i32
    %c0_i32_0 = arith.constant 0 : i32
    %c0_i32_1 = arith.constant 0 : i32
    return %c0_i32, %c0_i32_0 : i32, i32
  }
  func.func @transform_2(%arg0: i32) -> (i32, i32) {
    %c0_i32 = arith.constant 0 : i32
    %c0_i32_0 = arith.constant 0 : i32
    %c0_i32_1 = arith.constant 0 : i32
    return %c0_i32, %c0_i32_0 : i32, i32
  }
  func.func @transform_3(%arg0: i32) -> (i32, i32, i32) {
    %c0_i32 = arith.constant 0 : i32
    %c0_i32_0 = arith.constant 0 : i32
    %c0_i32_1 = arith.constant 0 : i32
    return %arg0, %c0_i32, %c0_i32_0 : i32, i32, i32
  }
  func.func @transform_4(%arg0: i32) -> (i32, i32) {
    %c0_i32 = arith.constant 0 : i32
    %c0_i32_0 = arith.constant 0 : i32
    return %arg0, %c0_i32 : i32, i32
  }
}

</mosaic_0001>

<llo_original>
// kernel: tpu_custom_call.1
$region0: #{tpu_custom_call.1}
  #allocation0 [shape = 'u32[]', space=smem, size = 0x4, offset = 0x4, fixed_abs, tag = 'smem constant byte address 0x4 - core index']
  #allocation1 [shape = 'u32[144,128]{1,0:T(1,128)}', space=vmem, size = 0x12000, scoped, tag = 'internal scratch']
  %s0 = inlined_call_operand.vmem [shape: f32[2,10], index: 0, kind: input, shape index: {}]
  %s1 = inlined_call_operand.hbm [shape: f32[10,96], index: 1, kind: input, shape index: {}]
  %s2 = inlined_call_operand.vmem [shape: f32[1,96], index: 2, kind: input, shape index: {}]
  %s3 = inlined_call_operand.vmem [shape: f32[2,3,32], index: 3, kind: input, shape index: {}]
  %s4 = inlined_call_operand.hbm [shape: f32[2,3072], index: 4, kind: output, shape index: {}]
  %s5 = sld [smem:[#allocation0]]
  $region30: #{tpu_custom_call.1} parent=0
    _
  %s7 = ssub.s32 1, %s5
  %s8 = scalar_select 0, %s7, %s5
  $region1: #{tpu_custom_call.1} parent=0
    #allocation2 [shape = 'u8[8192]{0}', space=vmem, size = 0x2000, scoped, tag = 'input window, operand 1, single buffered']
    #allocation3 [shape = 's32[1]{0}', space=sflag, size = 0x4, scoped, tag = 'scoped memory for tpu_custom_call.1']
    #allocation4 [shape = 's32[1]{0}', space=sflag, size = 0x4, scoped, tag = 'scoped memory for tpu_custom_call.1']
    #allocation5 [shape = 'u8[24576]{0}', space=vmem, size = 0x6000, scoped, tag = 'output window, operand 0, single buffered']
    %9 = vsyncpa [#allocation3], 0
    %10 = vsyncpa [#allocation4], 0
    // Predicated region
    $region2: #{tpu_custom_call.1} parent=1 // pred_check
      _
    $region3: #{tpu_custom_call.1} parent=1 // pred_check_branch
      %12 = sbr.rel (0) target = $region5
    $region4: #{tpu_custom_call.1} parent=1 // pred_region
      _
    $region5: #{tpu_custom_call.1} parent=1 // pred_fallthru
      _
    // Predicated region
    $region6: #{tpu_custom_call.1} parent=1 // pred_check
      _
    $region7: #{tpu_custom_call.1} parent=1 // pred_check_branch
      %14 = sbr.rel (0) target = $region9
    $region8: #{tpu_custom_call.1} parent=1 // pred_region
      %s16 = ssub.s32 256, 256
      %17 = vsyncadd [#allocation3], %s16
      %s18 = sshll.u32 [#allocation2], 4
      %s19 = int_to_ptr.vmem [resolvable:$true] %s18
      %24 = dma.hbm_to_vmem [thread:$0]  %s1, 256, %s19, [#allocation3], 128, 128, 8
    $region9: #{tpu_custom_call.1} parent=1 // pred_fallthru
      _
    // Predicated region
    $region10: #{tpu_custom_call.1} parent=1 // pred_check
      _
    $region11: #{tpu_custom_call.1} parent=1 // pred_check_branch
      %26 = sbr.rel (0) target = $region13
    $region12: #{tpu_custom_call.1} parent=1 // pred_region
      _
    $region13: #{tpu_custom_call.1} parent=1 // pred_fallthru
      _
    // Predicated region
    $region14: #{tpu_custom_call.1} parent=1 // pred_check
      _
    $region15: #{tpu_custom_call.1} parent=1 // pred_check_branch
      %28 = sbr.rel (0) target = $region17
    $region16: #{tpu_custom_call.1} parent=1 // pred_region
      _
    $region17: #{tpu_custom_call.1} parent=1 // pred_fallthru
      _
    // Predicated region
    $region18: #{tpu_custom_call.1} parent=1 // pred_check
      _
    $region19: #{tpu_custom_call.1} parent=1 // pred_check_branch
      %30 = sbr.rel (0) target = $region21
    $region20: #{tpu_custom_call.1} parent=1 // pred_region
      %31 = dma.done [#allocation3], 256
    $region21: #{tpu_custom_call.1} parent=1 // pred_fallthru
      _
    %v32 = vld [vmem:[%s0] sm:$0x3]
    %v33 = vld [vmem:[%s3] sm:$0x7]
    %v34 = vld [vmem:[%s3 + $0x4] sm:$0x7]
    %v35 = vld [vmem:[#allocation2] sm:$0xff]
    %v36 = vld [vmem:[#allocation2 + $0x8] sm:$0x3]
    %v37 = vld [vmem:[%s2] sm:$0x1]
    %v39 = vlaneseq
    %v40 = vshrl.u32 %v39, 7
    %v41 = vsub.s32 0, %v40
    %v42 = vrot.slane %v37, %v41
    %vm44 = vcmask 80896
    %v46 = vsel %vm44, %v32, 0
    %vm48 = vcmask 1041408
    %v50 = vsel %vm48, %v36, 0
    %52 = vmatprep.subr.mxu0 0.0
    %53 = vmatpush1.msra.mxu0 0.0
    %54 = vmatprep.subr.mxu0 0.0
    %55 = vmatpush1.msra.mxu0 0.0
    %56 = vmatprep.subr.mxu0 0.0
    %57 = vmatpush1.msra.mxu0 0.0
    %58 = vmatprep.subr.mxu0 0.0
    %59 = vmatpush1.msra.mxu0 0.0
    %60 = vmatprep.subr.mxu0 0.0
    %61 = vmatpush1.msra.mxu0 0.0
    %62 = vmatprep.subr.mxu0 0.0
    %63 = vmatpush1.msra.mxu0 0.0
    %64 = vmatprep.subr.mxu0 0.0
    %65 = vmatpush1.msra.mxu0 0.0
    %66 = vmatprep.subr.mxu0 0.0
    %67 = vmatpush1.msra.mxu0 0.0
    %68 = vmatprep.subr.mxu0 0.0
    %69 = vmatpush1.msra.mxu0 0.0
    %70 = vmatprep.subr.mxu0 0.0
    %71 = vmatpush1.msra.mxu0 0.0
    %72 = vmatprep.subr.mxu0 0.0
    %73 = vmatpush1.msra.mxu0 0.0
    %74 = vmatprep.subr.mxu0 0.0
    %75 = vmatpush1.msra.mxu0 0.0
    %76 = vmatprep.subr.mxu0 0.0
    %77 = vmatpush1.msra.mxu0 0.0
    %78 = vmatprep.subr.mxu0 0.0
    %79 = vmatpush1.msra.mxu0 0.0
    %80 = vmatprep.subr.mxu0 0.0
    %81 = vmatpush1.msra.mxu0 %v50
    %82 = vmatprep.subr.mxu0 0.0
    %83 = vmatpush1.msra.mxu0 %v35
    %84 = vmatprep.subr.mxu0 0.0
    %85 = vmatpush2.msra.mxu0 0.0
    %86 = vmatprep.subr.mxu0 0.0
    %87 = vmatpush2.msra.mxu0 0.0
    %88 = vmatprep.subr.mxu0 0.0
    %89 = vmatpush2.msra.mxu0 0.0
    %90 = vmatprep.subr.mxu0 0.0
    %91 = vmatpush2.msra.mxu0 0.0
    %92 = vmatprep.subr.mxu0 0.0
    %93 = vmatpush2.msra.mxu0 0.0
    %94 = vmatprep.subr.mxu0 0.0
    %95 = vmatpush2.msra.mxu0 0.0
    %96 = vmatprep.subr.mxu0 0.0
    %97 = vmatpush2.msra.mxu0 0.0
    %98 = vmatprep.subr.mxu0 0.0
    %99 = vmatpush2.msra.mxu0 0.0
    %100 = vmatprep.subr.mxu0 0.0
    %101 = vmatpush2.msra.mxu0 0.0
    %102 = vmatprep.subr.mxu0 0.0
    %103 = vmatpush2.msra.mxu0 0.0
    %104 = vmatprep.subr.mxu0 0.0
    %105 = vmatpush2.msra.mxu0 0.0
    %106 = vmatprep.subr.mxu0 0.0
    %107 = vmatpush2.msra.mxu0 0.0
    %108 = vmatprep.subr.mxu0 0.0
    %109 = vmatpush2.msra.mxu0 0.0
    %110 = vmatprep.subr.mxu0 0.0
    %111 = vmatpush2.msra.mxu0 0.0
    %112 = vmatprep.subr.mxu0 0.0
    %113 = vmatpush2.msra.mxu0 0.0
    %114 = vmatprep.subr.mxu0 0.0
    %115 = vmatpush2.msra.mxu0 0.0
    %116 = vmatprep.mubr.f32.mxu0 0.0
    %117 = vmatmul.mubr.f32.gmra.mxu0 %v46
    %v118 = vpop.f32.mrf.mxu0
    %v119 = vadd.f32 %v42, %v118
    %v120 = vpop.f32.mrf.mxu0
    %121 = vdwg.mxu0
    %v122 = vlaneseq
    %v123 = vshrl.u32 %v122, 7
    %v124 = vsub.s32 0, %v123
    %v125 = vrot.slane %v119, %v124
    %127 = vbcast.lane.b32.xlu0 %v125, 256
    %v128 = vpop.permute.xlu0 %127
    %s130 = sor.u32 256, 8
    %131 = vbcast.lane.b32.xlu0 %v125, %s130
    %v132 = vpop.permute.xlu0 %131
    %s134 = sor.u32 256, 16
    %135 = vbcast.lane.b32.xlu0 %v125, %s134
    %v136 = vpop.permute.xlu0 %135
    %s138 = sor.u32 256, 24
    %139 = vbcast.lane.b32.xlu0 %v125, %s138
    %v140 = vpop.permute.xlu0 %139
    %v141 = vlaneseq
    %v142 = vshrl.u32 %v141, 7
    %v143 = vsub.s32 1, %v142
    %v144 = vrot.slane %v119, %v143
    %146 = vbcast.lane.b32.xlu0 %v144, 256
    %v147 = vpop.permute.xlu0 %146
    %s149 = sor.u32 256, 8
    %150 = vbcast.lane.b32.xlu0 %v144, %s149
    %v151 = vpop.permute.xlu0 %150
    %s153 = sor.u32 256, 16
    %154 = vbcast.lane.b32.xlu0 %v144, %s153
    %v155 = vpop.permute.xlu0 %154
    %s157 = sor.u32 256, 24
    %158 = vbcast.lane.b32.xlu0 %v144, %s157
    %v159 = vpop.permute.xlu0 %158
    %v160 = vlaneseq
    %v161 = vshrl.u32 %v160, 7
    %v162 = vsub.s32 0, %v161
    %v163 = vrot.slane %v33, %v162
    %v164 = vlaneseq
    %v165 = vshrl.u32 %v164, 7
    %v166 = vsub.s32 0, %v165
    %v167 = vrot.slane %v34, %v166
    %v168 = vmul.f32 %v128, %v163
    %v169 = vmul.f32 %v132, %v163
    %v170 = vmul.f32 %v136, %v163
    %v171 = vmul.f32 %v140, %v163
    %v172 = vmul.f32 %v147, %v167
    %v173 = vmul.f32 %v151, %v167
    %v174 = vmul.f32 %v155, %v167
    %v175 = vmul.f32 %v159, %v167
    %v176 = vadd.f32 %v168, 0.0
    %v177 = vadd.f32 %v169, 0.0
    %v178 = vadd.f32 %v170, 0.0
    %v179 = vadd.f32 %v171, 0.0
    %v180 = vadd.f32 %v172, 0.0
    %v181 = vadd.f32 %v173, 0.0
    %v182 = vadd.f32 %v174, 0.0
    %v183 = vadd.f32 %v175, 0.0
    %s185 = sor.u32 256, 32
    %186 = vbcast.lane.b32.xlu0 %v125, %s185
    %v187 = vpop.permute.xlu0 %186
    %s189 = sor.u32 256, 40
    %190 = vbcast.lane.b32.xlu0 %v125, %s189
    %v191 = vpop.permute.xlu0 %190
    %s193 = sor.u32 256, 48
    %194 = vbcast.lane.b32.xlu0 %v125, %s193
    %v195 = vpop.permute.xlu0 %194
    %s197 = sor.u32 256, 56
    %198 = vbcast.lane.b32.xlu0 %v125, %s197
    %v199 = vpop.permute.xlu0 %198
    %s201 = sor.u32 256, 32
    %202 = vbcast.lane.b32.xlu0 %v144, %s201
    %v203 = vpop.permute.xlu0 %202
    %s205 = sor.u32 256, 40
    %206 = vbcast.lane.b32.xlu0 %v144, %s205
    %v207 = vpop.permute.xlu0 %206
    %s209 = sor.u32 256, 48
    %210 = vbcast.lane.b32.xlu0 %v144, %s209
    %v211 = vpop.permute.xlu0 %210
    %s213 = sor.u32 256, 56
    %214 = vbcast.lane.b32.xlu0 %v144, %s213
    %v215 = vpop.permute.xlu0 %214
    %v216 = vlaneseq
    %v217 = vshrl.u32 %v216, 7
    %v218 = vsub.s32 1, %v217
    %v219 = vrot.slane %v33, %v218
    %v220 = vlaneseq
    %v221 = vshrl.u32 %v220, 7
    %v222 = vsub.s32 1, %v221
    %v223 = vrot.slane %v34, %v222
    %v224 = vmul.f32 %v187, %v219
    %v225 = vmul.f32 %v191, %v219
    %v226 = vmul.f32 %v195, %v219
    %v227 = vmul.f32 %v199, %v219
    %v228 = vmul.f32 %v203, %v223
    %v229 = vmul.f32 %v207, %v223
    %v230 = vmul.f32 %v211, %v223
    %v231 = vmul.f32 %v215, %v223
    %v232 = vadd.f32 %v176, %v224
    %v233 = vadd.f32 %v177, %v225
    %v234 = vadd.f32 %v178, %v226
    %v235 = vadd.f32 %v179, %v227
    %v236 = vadd.f32 %v180, %v228
    %v237 = vadd.f32 %v181, %v229
    %v238 = vadd.f32 %v182, %v230
    %v239 = vadd.f32 %v183, %v231
    %s241 = sor.u32 256, 64
    %242 = vbcast.lane.b32.xlu0 %v125, %s241
    %v243 = vpop.permute.xlu0 %242
    %s245 = sor.u32 256, 72
    %246 = vbcast.lane.b32.xlu0 %v125, %s245
    %v247 = vpop.permute.xlu0 %246
    %s249 = sor.u32 256, 80
    %250 = vbcast.lane.b32.xlu0 %v125, %s249
    %v251 = vpop.permute.xlu0 %250
    %s253 = sor.u32 256, 88
    %254 = vbcast.lane.b32.xlu0 %v125, %s253
    %v255 = vpop.permute.xlu0 %254
    %s257 = sor.u32 256, 64
    %258 = vbcast.lane.b32.xlu0 %v144, %s257
    %v259 = vpop.permute.xlu0 %258
    %s261 = sor.u32 256, 72
    %262 = vbcast.lane.b32.xlu0 %v144, %s261
    %v263 = vpop.permute.xlu0 %262
    %s265 = sor.u32 256, 80
    %266 = vbcast.lane.b32.xlu0 %v144, %s265
    %v267 = vpop.permute.xlu0 %266
    %s269 = sor.u32 256, 88
    %270 = vbcast.lane.b32.xlu0 %v144, %s269
    %v271 = vpop.permute.xlu0 %270
    %v272 = vlaneseq
    %v273 = vshrl.u32 %v272, 7
    %v274 = vsub.s32 2, %v273
    %v275 = vrot.slane %v33, %v274
    %v276 = vlaneseq
    %v277 = vshrl.u32 %v276, 7
    %v278 = vsub.s32 2, %v277
    %v279 = vrot.slane %v34, %v278
    %v280 = vmul.f32 %v243, %v275
    %v281 = vmul.f32 %v247, %v275
    %v282 = vmul.f32 %v251, %v275
    %v283 = vmul.f32 %v255, %v275
    %v284 = vmul.f32 %v259, %v279
    %v285 = vmul.f32 %v263, %v279
    %v286 = vmul.f32 %v267, %v279
    %v287 = vmul.f32 %v271, %v279
    %v288 = vadd.f32 %v232, %v280
    %v289 = vadd.f32 %v233, %v281
    %v290 = vadd.f32 %v234, %v282
    %v291 = vadd.f32 %v235, %v283
    %v292 = vadd.f32 %v236, %v284
    %v293 = vadd.f32 %v237, %v285
    %v294 = vadd.f32 %v238, %v286
    %v295 = vadd.f32 %v239, %v287
    %v296 = vcombine.high %v288, 0.0
    %v298 = vunpack.c.l.s4 1983009808
    %v299 = vunpack.c.0.s8 %v298
    %v300 = vlaneseq
    %v301 = vshrl.u32 %v300, 7
    %v302 = vsub.s32 %v299, %v301
    %v303 = vrot.slane %v288, %v302
    %v305 = vunpack.c.l.s4 1983009808
    %v306 = vunpack.c.0.s8 %v305
    %v307 = vlaneseq
    %v308 = vshrl.u32 %v307, 7
    %v309 = vsub.s32 %v306, %v308
    %v310 = vrot.slane %v296, %v309
    %v311 = vcombine.high %v292, 0.0
    %v313 = vunpack.c.l.s4 1983009808
    %v314 = vunpack.c.0.s8 %v313
    %v315 = vlaneseq
    %v316 = vshrl.u32 %v315, 7
    %v317 = vsub.s32 %v314, %v316
    %v318 = vrot.slane %v292, %v317
    %v320 = vunpack.c.l.s4 1983009808
    %v321 = vunpack.c.0.s8 %v320
    %v322 = vlaneseq
    %v323 = vshrl.u32 %v322, 7
    %v324 = vsub.s32 %v321, %v323
    %v325 = vrot.slane %v311, %v324
    %v326 = vcombine.low %v303, %v318
    %v327 = vcombine.high %v303, %v318
    %v329 = vunpack.c.l.s4 1934713408
    %v330 = vunpack.c.0.s8 %v329
    %v331 = vlaneseq
    %v332 = vshrl.u32 %v331, 7
    %v333 = vsub.s32 %v330, %v332
    %v334 = vrot.slane %v326, %v333
    %v336 = vunpack.c.l.s4 1934713408
    %v337 = vunpack.c.0.s8 %v336
    %v338 = vlaneseq
    %v339 = vshrl.u32 %v338, 7
    %v340 = vsub.s32 %v337, %v339
    %v341 = vrot.slane %v327, %v340
    %v342 = vcombine.low %v310, %v325
    %v343 = vcombine.high %v310, %v325
    %v345 = vunpack.c.l.s4 1934713408
    %v346 = vunpack.c.0.s8 %v345
    %v347 = vlaneseq
    %v348 = vshrl.u32 %v347, 7
    %v349 = vsub.s32 %v346, %v348
    %v350 = vrot.slane %v342, %v349
    %v352 = vunpack.c.l.s4 1934713408
    %v353 = vunpack.c.0.s8 %v352
    %v354 = vlaneseq
    %v355 = vshrl.u32 %v354, 7
    %v356 = vsub.s32 %v353, %v355
    %v357 = vrot.slane %v343, %v356
    %v358 = vcombine.high %v334, 0.0
    %v359 = vcombine.high %v341, 0.0
    %v360 = vcombine.high %v350, 0.0
    %v361 = vcombine.high %v357, 0.0
    %v362 = vcombine.high %v289, 0.0
    %v364 = vunpack.c.l.s4 1983009808
    %v365 = vunpack.c.0.s8 %v364
    %v366 = vlaneseq
    %v367 = vshrl.u32 %v366, 7
    %v368 = vsub.s32 %v365, %v367
    %v369 = vrot.slane %v289, %v368
    %v371 = vunpack.c.l.s4 1983009808
    %v372 = vunpack.c.0.s8 %v371
    %v373 = vlaneseq
    %v374 = vshrl.u32 %v373, 7
    %v375 = vsub.s32 %v372, %v374
    %v376 = vrot.slane %v362, %v375
    %v377 = vcombine.high %v293, 0.0
    %v379 = vunpack.c.l.s4 1983009808
    %v380 = vunpack.c.0.s8 %v379
    %v381 = vlaneseq
    %v382 = vshrl.u32 %v381, 7
    %v383 = vsub.s32 %v380, %v382
    %v384 = vrot.slane %v293, %v383
    %v386 = vunpack.c.l.s4 1983009808
    %v387 = vunpack.c.0.s8 %v386
    %v388 = vlaneseq
    %v389 = vshrl.u32 %v388, 7
    %v390 = vsub.s32 %v387, %v389
    %v391 = vrot.slane %v377, %v390
    %v392 = vcombine.low %v369, %v384
    %v393 = vcombine.high %v369, %v384
    %v395 = vunpack.c.l.s4 1934713408
    %v396 = vunpack.c.0.s8 %v395
    %v397 = vlaneseq
    %v398 = vshrl.u32 %v397, 7
    %v399 = vsub.s32 %v396, %v398
    %v400 = vrot.slane %v392, %v399
    %v402 = vunpack.c.l.s4 1934713408
    %v403 = vunpack.c.0.s8 %v402
    %v404 = vlaneseq
    %v405 = vshrl.u32 %v404, 7
    %v406 = vsub.s32 %v403, %v405
    %v407 = vrot.slane %v393, %v406
    %v408 = vcombine.low %v376, %v391
    %v409 = vcombine.high %v376, %v391
    %v411 = vunpack.c.l.s4 1934713408
    %v412 = vunpack.c.0.s8 %v411
    %v413 = vlaneseq
    %v414 = vshrl.u32 %v413, 7
    %v415 = vsub.s32 %v412, %v414
    %v416 = vrot.slane %v408, %v415
    %v418 = vunpack.c.l.s4 1934713408
    %v419 = vunpack.c.0.s8 %v418
    %v420 = vlaneseq
    %v421 = vshrl.u32 %v420, 7
    %v422 = vsub.s32 %v419, %v421
    %v423 = vrot.slane %v409, %v422
    %v424 = vcombine.high %v400, 0.0
    %v425 = vcombine.high %v407, 0.0
    %v426 = vcombine.high %v416, 0.0
    %v427 = vcombine.high %v423, 0.0
    %v428 = vcombine.high %v290, 0.0
    %v430 = vunpack.c.l.s4 1983009808
    %v431 = vunpack.c.0.s8 %v430
    %v432 = vlaneseq
    %v433 = vshrl.u32 %v432, 7
    %v434 = vsub.s32 %v431, %v433
    %v435 = vrot.slane %v290, %v434
    %v437 = vunpack.c.l.s4 1983009808
    %v438 = vunpack.c.0.s8 %v437
    %v439 = vlaneseq
    %v440 = vshrl.u32 %v439, 7
    %v441 = vsub.s32 %v438, %v440
    %v442 = vrot.slane %v428, %v441
    %v443 = vcombine.high %v294, 0.0
    %v445 = vunpack.c.l.s4 1983009808
    %v446 = vunpack.c.0.s8 %v445
    %v447 = vlaneseq
    %v448 = vshrl.u32 %v447, 7
    %v449 = vsub.s32 %v446, %v448
    %v450 = vrot.slane %v294, %v449
    %v452 = vunpack.c.l.s4 1983009808
    %v453 = vunpack.c.0.s8 %v452
    %v454 = vlaneseq
    %v455 = vshrl.u32 %v454, 7
    %v456 = vsub.s32 %v453, %v455
    %v457 = vrot.slane %v443, %v456
    %v458 = vcombine.low %v435, %v450
    %v459 = vcombine.high %v435, %v450
    %v461 = vunpack.c.l.s4 1934713408
    %v462 = vunpack.c.0.s8 %v461
    %v463 = vlaneseq
    %v464 = vshrl.u32 %v463, 7
    %v465 = vsub.s32 %v462, %v464
    %v466 = vrot.slane %v458, %v465
    %v468 = vunpack.c.l.s4 1934713408
    %v469 = vunpack.c.0.s8 %v468
    %v470 = vlaneseq
    %v471 = vshrl.u32 %v470, 7
    %v472 = vsub.s32 %v469, %v471
    %v473 = vrot.slane %v459, %v472
    %v474 = vcombine.low %v442, %v457
    %v475 = vcombine.high %v442, %v457
    %v477 = vunpack.c.l.s4 1934713408
    %v478 = vunpack.c.0.s8 %v477
    %v479 = vlaneseq
    %v480 = vshrl.u32 %v479, 7
    %v481 = vsub.s32 %v478, %v480
    %v482 = vrot.slane %v474, %v481
    %v484 = vunpack.c.l.s4 1934713408
    %v485 = vunpack.c.0.s8 %v484
    %v486 = vlaneseq
    %v487 = vshrl.u32 %v486, 7
    %v488 = vsub.s32 %v485, %v487
    %v489 = vrot.slane %v475, %v488
    %v490 = vcombine.high %v466, 0.0
    %v491 = vcombine.high %v473, 0.0
    %v492 = vcombine.high %v482, 0.0
    %v493 = vcombine.high %v489, 0.0
    %v494 = vcombine.high %v291, 0.0
    %v496 = vunpack.c.l.s4 1983009808
    %v497 = vunpack.c.0.s8 %v496
    %v498 = vlaneseq
    %v499 = vshrl.u32 %v498, 7
    %v500 = vsub.s32 %v497, %v499
    %v501 = vrot.slane %v291, %v500
    %v503 = vunpack.c.l.s4 1983009808
    %v504 = vunpack.c.0.s8 %v503
    %v505 = vlaneseq
    %v506 = vshrl.u32 %v505, 7
    %v507 = vsub.s32 %v504, %v506
    %v508 = vrot.slane %v494, %v507
    %v509 = vcombine.high %v295, 0.0
    %v511 = vunpack.c.l.s4 1983009808
    %v512 = vunpack.c.0.s8 %v511
    %v513 = vlaneseq
    %v514 = vshrl.u32 %v513, 7
    %v515 = vsub.s32 %v512, %v514
    %v516 = vrot.slane %v295, %v515
    %v518 = vunpack.c.l.s4 1983009808
    %v519 = vunpack.c.0.s8 %v518
    %v520 = vlaneseq
    %v521 = vshrl.u32 %v520, 7
    %v522 = vsub.s32 %v519, %v521
    %v523 = vrot.slane %v509, %v522
    %v524 = vcombine.low %v501, %v516
    %v525 = vcombine.high %v501, %v516
    %v527 = vunpack.c.l.s4 1934713408
    %v528 = vunpack.c.0.s8 %v527
    %v529 = vlaneseq
    %v530 = vshrl.u32 %v529, 7
    %v531 = vsub.s32 %v528, %v530
    %v532 = vrot.slane %v524, %v531
    %v534 = vunpack.c.l.s4 1934713408
    %v535 = vunpack.c.0.s8 %v534
    %v536 = vlaneseq
    %v537 = vshrl.u32 %v536, 7
    %v538 = vsub.s32 %v535, %v537
    %v539 = vrot.slane %v525, %v538
    %v540 = vcombine.low %v508, %v523
    %v541 = vcombine.high %v508, %v523
    %v543 = vunpack.c.l.s4 1934713408
    %v544 = vunpack.c.0.s8 %v543
    %v545 = vlaneseq
    %v546 = vshrl.u32 %v545, 7
    %v547 = vsub.s32 %v544, %v546
    %v548 = vrot.slane %v540, %v547
    %v550 = vunpack.c.l.s4 1934713408
    %v551 = vunpack.c.0.s8 %v550
    %v552 = vlaneseq
    %v553 = vshrl.u32 %v552, 7
    %v554 = vsub.s32 %v551, %v553
    %v555 = vrot.slane %v541, %v554
    %v556 = vcombine.high %v532, 0.0
    %v557 = vcombine.high %v539, 0.0
    %v558 = vcombine.high %v548, 0.0
    %v559 = vcombine.high %v555, 0.0
    %561 = vrot.lane.b32.xlu0 %v358, 32
    %v562 = vpop.permute.xlu0 %561
    %565 = vrot.lane.b32.xlu0 %v341, 64
    %v566 = vpop.permute.xlu0 %565
    %569 = vrot.lane.b32.xlu0 %v359, 96
    %v570 = vpop.permute.xlu0 %569
    %573 = vrot.lane.b32.xlu0 %v360, 32
    %v574 = vpop.permute.xlu0 %573
    %577 = vrot.lane.b32.xlu0 %v357, 64
    %v578 = vpop.permute.xlu0 %577
    %581 = vrot.lane.b32.xlu0 %v361, 96
    %v582 = vpop.permute.xlu0 %581
    %585 = vrot.lane.b32.xlu0 %v424, 32
    %v586 = vpop.permute.xlu0 %585
    %589 = vrot.lane.b32.xlu0 %v407, 64
    %v590 = vpop.permute.xlu0 %589
    %593 = vrot.lane.b32.xlu0 %v425, 96
    %v594 = vpop.permute.xlu0 %593
    %597 = vrot.lane.b32.xlu0 %v426, 32
    %v598 = vpop.permute.xlu0 %597
    %601 = vrot.lane.b32.xlu0 %v423, 64
    %v602 = vpop.permute.xlu0 %601
    %605 = vrot.lane.b32.xlu0 %v427, 96
    %v606 = vpop.permute.xlu0 %605
    %609 = vrot.lane.b32.xlu0 %v490, 32
    %v610 = vpop.permute.xlu0 %609
    %613 = vrot.lane.b32.xlu0 %v473, 64
    %v614 = vpop.permute.xlu0 %613
    %617 = vrot.lane.b32.xlu0 %v491, 96
    %v618 = vpop.permute.xlu0 %617
    %621 = vrot.lane.b32.xlu0 %v492, 32
    %v622 = vpop.permute.xlu0 %621
    %625 = vrot.lane.b32.xlu0 %v489, 64
    %v626 = vpop.permute.xlu0 %625
    %629 = vrot.lane.b32.xlu0 %v493, 96
    %v630 = vpop.permute.xlu0 %629
    %633 = vrot.lane.b32.xlu0 %v556, 32
    %v634 = vpop.permute.xlu0 %633
    %637 = vrot.lane.b32.xlu0 %v539, 64
    %v638 = vpop.permute.xlu0 %637
    %641 = vrot.lane.b32.xlu0 %v557, 96
    %v642 = vpop.permute.xlu0 %641
    %645 = vrot.lane.b32.xlu0 %v558, 32
    %v646 = vpop.permute.xlu0 %645
    %649 = vrot.lane.b32.xlu0 %v555, 64
    %v650 = vpop.permute.xlu0 %649
    %653 = vrot.lane.b32.xlu0 %v559, 96
    %v654 = vpop.permute.xlu0 %653
    %vm656 = vcmask 261120
    %v657 = vsel %vm656, %v334, %v562
    %vm658 = vcmask 523264
    %v659 = vsel %vm658, %v657, %v566
    %vm660 = vcmask 785408
    %v661 = vsel %vm660, %v659, %v570
    %v662 = vsel %vm656, %v350, %v574
    %v663 = vsel %vm658, %v662, %v578
    %v664 = vsel %vm660, %v663, %v582
    %v665 = vsel %vm656, %v400, %v586
    %v666 = vsel %vm658, %v665, %v590
    %v667 = vsel %vm660, %v666, %v594
    %v668 = vsel %vm656, %v416, %v598
    %v669 = vsel %vm658, %v668, %v602
    %v670 = vsel %vm660, %v669, %v606
    %v671 = vsel %vm656, %v466, %v610
    %v672 = vsel %vm658, %v671, %v614
    %v673 = vsel %vm660, %v672, %v618
    %v674 = vsel %vm656, %v482, %v622
    %v675 = vsel %vm658, %v674, %v626
    %v676 = vsel %vm660, %v675, %v630
    %v677 = vsel %vm656, %v532, %v634
    %v678 = vsel %vm658, %v677, %v638
    %v679 = vsel %vm660, %v678, %v642
    %v680 = vsel %vm656, %v548, %v646
    %v681 = vsel %vm658, %v680, %v650
    %v682 = vsel %vm660, %v681, %v654
    %v691 = vcombine.low %v661, %v664
    %v692 = vcombine.low %v667, %v670
    %v694 = vunpack.c.l.s4 1983009808
    %v695 = vunpack.c.0.s8 %v694
    %v696 = vlaneseq
    %v697 = vshrl.u32 %v696, 7
    %v698 = vsub.s32 %v695, %v697
    %v699 = vrot.slane %v691, %v698
    %v701 = vunpack.c.l.s4 1983009808
    %v702 = vunpack.c.0.s8 %v701
    %v703 = vlaneseq
    %v704 = vshrl.u32 %v703, 7
    %v705 = vsub.s32 %v702, %v704
    %v706 = vrot.slane %v692, %v705
    %v707 = vcombine.low %v699, %v706
    %v708 = vcombine.low %v673, %v676
    %v709 = vcombine.low %v679, %v682
    %v711 = vunpack.c.l.s4 1983009808
    %v712 = vunpack.c.0.s8 %v711
    %v713 = vlaneseq
    %v714 = vshrl.u32 %v713, 7
    %v715 = vsub.s32 %v712, %v714
    %v716 = vrot.slane %v708, %v715
    %v718 = vunpack.c.l.s4 1983009808
    %v719 = vunpack.c.0.s8 %v718
    %v720 = vlaneseq
    %v721 = vshrl.u32 %v720, 7
    %v722 = vsub.s32 %v719, %v721
    %v723 = vrot.slane %v709, %v722
    %v724 = vcombine.low %v716, %v723
    %727 = vst [vmem:[#allocation5] sm:$0xff] %v707
    %728 = vst [vmem:[#allocation5 + $0x8] sm:$0xff] %v724
    %729 = vst [vmem:[#allocation5 + $0x10] sm:$0xff] %v707
    %730 = vst [vmem:[#allocation5 + $0x18] sm:$0xff] %v724
    %731 = vst [vmem:[#allocation5 + $0x20] sm:$0xff] %v707
    %732 = vst [vmem:[#allocation5 + $0x28] sm:$0xff] %v724
    // Predicated region
    $region22: #{tpu_custom_call.1} parent=1 // pred_check
      _
    $region23: #{tpu_custom_call.1} parent=1 // pred_check_branch
      %734 = sbr.rel (0) target = $region25
    $region24: #{tpu_custom_call.1} parent=1 // pred_region
      %s736 = ssub.s32 768, 768
      %737 = vsyncadd [#allocation4], %s736
      %s739 = sshll.u32 [#allocation5], 4
      %s740 = int_to_ptr.vmem [resolvable:$true] %s739
      %742 = dma.vmem_to_hbm [thread:$0]  %s740, 768, %s4, [#allocation4]
    $region25: #{tpu_custom_call.1} parent=1 // pred_fallthru
      _
    // Predicated region
    $region26: #{tpu_custom_call.1} parent=1 // pred_check
      _
    $region27: #{tpu_custom_call.1} parent=1 // pred_check_branch
      %744 = sbr.rel (0) target = $region29
    $region28: #{tpu_custom_call.1} parent=1 // pred_region
      %745 = dma.done [#allocation4], 768
    $region29: #{tpu_custom_call.1} parent=1 // pred_fallthru
      _
    %746 = vsyncpa [#allocation3], 1
    %747 = vsyncpa [#allocation4], 1

</llo_original>
